<compile_context>
chip_gen: v7x
topology: tpu7x:2x2x1
jax: 0.10.0
libtpu: 0.0.40
codegen_flags: <defaults>
</compile_context>

<pallas_src>
import jax
import jax.numpy as jnp
from jax import lax
from jax.experimental import pallas as pl
from jax.experimental.pallas import tpu as pltpu


def _ln_withbias_kernel(x_ref, w_ref, b_ref, o_ref):
    # x_ref block: (1, C, tile_r, L).  Reduction over C (leading axis) = pure VPU vreg adds.
    xf = x_ref[0].astype(jnp.float32)                        # (C, tile_r, L)
    inv_c = jnp.float32(1.0 / xf.shape[0])
    s1 = jnp.sum(xf, axis=0, keepdims=True)                  # (1, tile_r, L)
    s2 = jnp.sum(xf * xf, axis=0, keepdims=True)
    mu = s1 * inv_c
    var = s2 * inv_c - mu * mu                               # single-pass moments
    inv = lax.rsqrt(var + jnp.float32(1e-5))                 # EUP slot
    # Second pass re-reads x_ref instead of keeping a centered f32 block live.
    y = (x_ref[0].astype(jnp.float32) - mu) * inv * w_ref[0] + b_ref[0]
    o_ref[0] = y.astype(o_ref.dtype)


def _ln_biasfree_kernel(x_ref, w_ref, o_ref):
    xf = x_ref[0].astype(jnp.float32)                        # (C, tile_r, L)
    inv_c = jnp.float32(1.0 / xf.shape[0])
    s1 = jnp.sum(xf, axis=0, keepdims=True)
    s2 = jnp.sum(xf * xf, axis=0, keepdims=True)
    mu = s1 * inv_c
    var = s2 * inv_c - mu * mu                               # variance IS mean-subtracted ...
    inv = lax.rsqrt(var + jnp.float32(1e-5))
    y = x_ref[0].astype(jnp.float32) * inv * w_ref[0]        # ... but x itself is NOT centered
    o_ref[0] = y.astype(o_ref.dtype)


def _spatial_factors(S):
    """Factor S = R * L with L the lane dim. Prefer L == 128 (unmasked lane-dense stores and
    maximum tiling flexibility on R); otherwise put everything in lanes (full-extent dims)."""
    if S % 128 == 0:
        return S // 128, 128
    return 1, S


def _vmem_plan():
    """(vmem_limit_bytes, per-step footprint budget) chosen per TPU generation."""
    cap = 64 << 20                                           # conservative default (v7x)
    try:
        cap = int(getattr(pltpu.get_tpu_info(), "vmem_capacity_bytes", cap))
    except Exception:
        pass
    limit = min((3 * cap) // 4, 112 << 20)                   # ~96 MiB v5e/v6e, ~48 MiB v7x
    budget = max(limit - (4 << 20), 2 << 20)                 # headroom for params / scheduler
    return limit, budget


def _pick_tile_r(R, C, L, itemsize, min_sub, budget_bytes, batch, min_total_steps=8):
    """Largest sublane-aligned divisor of R whose double-buffered in+out blocks (plus the f32
    intermediates the kernel creates) fit the budget, while keeping enough total grid steps
    for the pipeline / both v7x TensorCores."""
    cands = [d for d in range(R, 0, -1) if R % d == 0 and (d % min_sub == 0 or d == R)]

    def footprint(d):
        blk = C * d * L
        # 2x double-buffered (input + output block) + ~2 f32 blocks of in-kernel intermediates.
        return 4 * blk * itemsize + 2 * blk * 4

    fitting = [d for d in cands if footprint(d) <= budget_bytes]
    if not fitting:
        return cands[-1]                                     # best effort: smallest aligned divisor
    for d in fitting:                                        # descending: biggest tile first
        if batch * (R // d) >= min_total_steps:
            return d                                         # biggest tile with enough steps
    return fitting[0]                                        # grid can't reach min steps anyway


def layernorm(x, weight, bias=None, *, layernorm_type="WithBias", tile_r=None):
    """LayerNorm over the channel axis of an NCHW tensor (GLCONet LayerNorm forward)."""
    B, C, H, W = x.shape
    S = H * W
    itemsize = jnp.dtype(x.dtype).itemsize
    min_sub = max(8, 32 // itemsize)                         # dtype-aware sublane alignment
    R, L = _spatial_factors(S)
    vmem_limit, budget = _vmem_plan()
    if tile_r is None:
        tile_r = _pick_tile_r(R, C, L, itemsize, min_sub, budget, B)
    assert R % tile_r == 0, "tile_r must divide the flattened spatial row count"
    n_s = R // tile_r

    xr = x.reshape(B, C, R, L)                               # free: NCHW is contiguous over (H, W)

    blk = (1, C, tile_r, L)
    x_spec = pl.BlockSpec(blk, lambda b, i: (b, 0, i, 0))
    o_spec = pl.BlockSpec(blk, lambda b, i: (b, 0, i, 0))
    p_spec = pl.BlockSpec((1, C, 1, 1), lambda b, i: (0, 0, 0, 0))

    cost = pl.CostEstimate(
        flops=int(9 * B * C * S),
        transcendentals=int(B * S),
        bytes_accessed=int(2 * B * C * S * itemsize + 2 * C * 4),
    )
    cparams = pltpu.CompilerParams(
        dimension_semantics=("parallel", "parallel"),        # both grid axes independent
        vmem_limit_bytes=vmem_limit,
    )

    w4 = weight.astype(jnp.float32).reshape(1, C, 1, 1)

    if layernorm_type == "BiasFree":
        out = pl.pallas_call(
            _ln_biasfree_kernel,
            out_shape=jax.ShapeDtypeStruct((B, C, R, L), x.dtype),
            grid_spec=pltpu.PrefetchScalarGridSpec(
                num_scalar_prefetch=0, grid=(B, n_s),
                in_specs=[x_spec, p_spec], out_specs=o_spec),
            compiler_params=cparams, cost_estimate=cost,
        )(xr, w4)
    else:
        b_arr = jnp.zeros((C,), jnp.float32) if bias is None else bias.astype(jnp.float32)
        b4 = b_arr.reshape(1, C, 1, 1)
        out = pl.pallas_call(
            _ln_withbias_kernel,
            out_shape=jax.ShapeDtypeStruct((B, C, R, L), x.dtype),
            grid_spec=pltpu.PrefetchScalarGridSpec(
                num_scalar_prefetch=0, grid=(B, n_s),
                in_specs=[x_spec, p_spec, p_spec], out_specs=o_spec),
            compiler_params=cparams, cost_estimate=cost,
        )(xr, w4, b4)
    return out.reshape(B, C, H, W)                           # free reshape back to NCHW


def layernorm_ref(x, weight, bias, layernorm_type):
    """Pure-JAX reference mirroring the PyTorch module (to_3d -> LN over C -> to_4d)."""
    xt = jnp.transpose(x, (0, 2, 3, 1)).astype(jnp.float32)  # (B, H, W, C)
    mu = jnp.mean(xt, -1, keepdims=True)
    var = jnp.mean((xt - mu) ** 2, -1, keepdims=True)
    if layernorm_type == "BiasFree":
        y = xt / jnp.sqrt(var + 1e-5) * weight
    else:
        y = (xt - mu) / jnp.sqrt(var + 1e-5) * weight + bias
    return jnp.transpose(y, (0, 3, 1, 2)).astype(x.dtype)


if __name__ == "__main__":
    key = jax.random.PRNGKey(0)
    kx, kw, kb, kx2 = jax.random.split(key, 4)

    B, dim, H, W = 2, 4, 16, 16
    x = jax.random.normal(kx, (B, dim, H, W), jnp.float32)   # NCHW, PyTorch convention

    # weight_init: LayerNorm weight -> ones, bias -> zeros; plus random params to exercise paths.
    w_init = jnp.ones((dim,), jnp.float32)
    b_init = jnp.zeros((dim,), jnp.float32)
    w_rand = jax.random.normal(kw, (dim,), jnp.float32)
    b_rand = jax.random.normal(kb, (dim,), jnp.float32)

    # Tolerance note: the kernel uses single-pass moments (E[x^2] - mu^2); with only C=4
    # channels the per-pixel variance can be small, so allow a slightly looser f32 tolerance
    # than bit-exact two-pass math would need. Semantic bugs would produce O(1) errors.
    def check(x_, w_, b_, ln_type, tile_r=None, tol=2e-3):
        out = layernorm(x_, w_, b_, layernorm_type=ln_type, tile_r=tile_r)
        jax.block_until_ready(out)
        ref = layernorm_ref(x_, w_, jnp.zeros_like(w_) if b_ is None else b_, ln_type)
        assert out.shape == x_.shape and out.dtype == x_.dtype
        assert jnp.allclose(out, ref, atol=tol, rtol=tol), f"mismatch for {ln_type}"

    check(x, w_init, b_init, "WithBias")                     # init params (ones / zeros)
    check(x, w_rand, b_rand, "WithBias")                     # random per-channel scale / shift
    check(x, w_rand, None, "BiasFree")                       # bias-free variant

    # Larger spatial size, forced tile: exercises the multi-step spatial grid (R=32, tile_r=8).
    x_big = jax.random.normal(kx2, (B, dim, 64, 64), jnp.float32)
    check(x_big, w_rand, b_rand, "WithBias", tile_r=8)

    # bf16 I/O: exercises the dtype-aware sublane-alignment path.
    check(x_big.astype(jnp.bfloat16), w_rand, b_rand, "WithBias", tol=3e-2)

    print("KERNEL_OK")
</pallas_src>

<mosaic_0001>
module attributes {stable_mosaic.version = 11 : i64} {
  func.func @_ln_withbias_kernel(%arg0: i32, %arg1: i32, %arg2: memref<1x4x2x128xf32, #tpu.memory_space<vmem>>, %arg3: memref<1x4x1x1xf32, #tpu.memory_space<vmem>>, %arg4: memref<1x4x1x1xf32, #tpu.memory_space<vmem>>, %arg5: memref<1x4x2x128xf32, #tpu.memory_space<vmem>>) attributes {dimension_semantics = [#tpu.dimension_semantics<parallel>, #tpu.dimension_semantics<parallel>], iteration_bounds = array<i64: 2, 1>, scalar_prefetch = 0 : i64, scratch_operands = 0 : i64, tpu.core_type = #tpu.core_type<tc>, window_params = [{transform_indices = @transform_0, window_bounds = array<i64: 1, 4, 2, 128>}, {pipeline_mode = #tpu.pipeline_mode<synchronous>, transform_indices = @transform_1, window_bounds = array<i64: 1, 4, 1, 1>}, {pipeline_mode = #tpu.pipeline_mode<synchronous>, transform_indices = @transform_2, window_bounds = array<i64: 1, 4, 1, 1>}, {transform_indices = @transform_3, window_bounds = array<i64: 1, 4, 2, 128>}]} {
    %c0 = arith.constant 0 : index
    %c0_0 = arith.constant 0 : index
    %c0_1 = arith.constant 0 : index
    %c0_2 = arith.constant 0 : index
    %0 = vector.load %arg2[%c0, %c0_0, %c0_1, %c0_2] : memref<1x4x2x128xf32, #tpu.memory_space<vmem>>, vector<1x4x2x128xf32>
    %1 = vector.shape_cast %0 : vector<1x4x2x128xf32> to vector<4x2x128xf32>
    %cst = arith.constant dense<0.000000e+00> : vector<2x128xf32>
    %2 = vector.multi_reduction <add>, %1, %cst [0] : vector<4x2x128xf32> to vector<2x128xf32>
    %3 = vector.shape_cast %2 : vector<2x128xf32> to vector<1x2x128xf32>
    %4 = arith.mulf %1, %1 : vector<4x2x128xf32>
    %cst_3 = arith.constant dense<0.000000e+00> : vector<2x128xf32>
    %5 = vector.multi_reduction <add>, %4, %cst_3 [0] : vector<4x2x128xf32> to vector<2x128xf32>
    %6 = vector.shape_cast %5 : vector<2x128xf32> to vector<1x2x128xf32>
    %cst_4 = arith.constant 2.500000e-01 : f32
    %7 = vector.broadcast %cst_4 : f32 to vector<1x2x128xf32>
    %8 = arith.mulf %3, %7 : vector<1x2x128xf32>
    %cst_5 = arith.constant 2.500000e-01 : f32
    %9 = vector.broadcast %cst_5 : f32 to vector<1x2x128xf32>
    %10 = arith.mulf %6, %9 : vector<1x2x128xf32>
    %11 = arith.mulf %8, %8 : vector<1x2x128xf32>
    %12 = arith.subf %10, %11 : vector<1x2x128xf32>
    %cst_6 = arith.constant 9.99999974E-6 : f32
    %13 = vector.broadcast %cst_6 : f32 to vector<1x2x128xf32>
    %14 = arith.addf %12, %13 : vector<1x2x128xf32>
    %15 = math.rsqrt %14 : vector<1x2x128xf32>
    %c0_7 = arith.constant 0 : index
    %c0_8 = arith.constant 0 : index
    %c0_9 = arith.constant 0 : index
    %c0_10 = arith.constant 0 : index
    %16 = vector.load %arg2[%c0_7, %c0_8, %c0_9, %c0_10] : memref<1x4x2x128xf32, #tpu.memory_space<vmem>>, vector<1x4x2x128xf32>
    %17 = vector.shape_cast %16 : vector<1x4x2x128xf32> to vector<4x2x128xf32>
    %18 = vector.broadcast %8 : vector<1x2x128xf32> to vector<4x2x128xf32>
    %19 = arith.subf %17, %18 : vector<4x2x128xf32>
    %20 = vector.broadcast %15 : vector<1x2x128xf32> to vector<4x2x128xf32>
    %21 = arith.mulf %19, %20 : vector<4x2x128xf32>
    %c0_11 = arith.constant 0 : index
    %c0_12 = arith.constant 0 : index
    %c0_13 = arith.constant 0 : index
    %c0_14 = arith.constant 0 : index
    %22 = vector.load %arg3[%c0_11, %c0_12, %c0_13, %c0_14] : memref<1x4x1x1xf32, #tpu.memory_space<vmem>>, vector<1x4x1x1xf32>
    %23 = vector.shape_cast %22 : vector<1x4x1x1xf32> to vector<4x1x1xf32>
    %24 = vector.broadcast %23 : vector<4x1x1xf32> to vector<4x2x128xf32>
    %25 = arith.mulf %21, %24 : vector<4x2x128xf32>
    %c0_15 = arith.constant 0 : index
    %c0_16 = arith.constant 0 : index
    %c0_17 = arith.constant 0 : index
    %c0_18 = arith.constant 0 : index
    %26 = vector.load %arg4[%c0_15, %c0_16, %c0_17, %c0_18] : memref<1x4x1x1xf32, #tpu.memory_space<vmem>>, vector<1x4x1x1xf32>
    %27 = vector.shape_cast %26 : vector<1x4x1x1xf32> to vector<4x1x1xf32>
    %28 = vector.broadcast %27 : vector<4x1x1xf32> to vector<4x2x128xf32>
    %29 = arith.addf %25, %28 : vector<4x2x128xf32>
    %c0_19 = arith.constant 0 : index
    %c0_20 = arith.constant 0 : index
    %c0_21 = arith.constant 0 : index
    %c0_22 = arith.constant 0 : index
    %30 = vector.load %arg5[%c0_19, %c0_20, %c0_21, %c0_22] : memref<1x4x2x128xf32, #tpu.memory_space<vmem>>, vector<1x4x2x128xf32>
    %31 = vector.shape_cast %30 : vector<1x4x2x128xf32> to vector<4x2x128xf32>
    %32 = vector.shape_cast %29 : vector<4x2x128xf32> to vector<1x4x2x128xf32>
    tpu.vector_store %arg5[%c0_19, %c0_20, %c0_21, %c0_22], %32 {strides = array<i32>} : memref<1x4x2x128xf32, #tpu.memory_space<vmem>>, vector<1x4x2x128xf32>,
    return
  }
  func.func @transform_0(%arg0: i32, %arg1: i32) -> (i32, i32, i32, i32) {
    %c0_i32 = arith.constant 0 : i32
    %c0_i32_0 = arith.constant 0 : i32
    %c0_i32_1 = arith.constant 0 : i32
    return %arg0, %c0_i32, %arg1, %c0_i32_0 : i32, i32, i32, i32
  }
  func.func @transform_1(%arg0: i32, %arg1: i32) -> (i32, i32, i32, i32) {
    %c0_i32 = arith.constant 0 : i32
    %c0_i32_0 = arith.constant 0 : i32
    %c0_i32_1 = arith.constant 0 : i32
    %c0_i32_2 = arith.constant 0 : i32
    %c0_i32_3 = arith.constant 0 : i32
    return %c0_i32, %c0_i32_0, %c0_i32_1, %c0_i32_2 : i32, i32, i32, i32
  }
  func.func @transform_2(%arg0: i32, %arg1: i32) -> (i32, i32, i32, i32) {
    %c0_i32 = arith.constant 0 : i32
    %c0_i32_0 = arith.constant 0 : i32
    %c0_i32_1 = arith.constant 0 : i32
    %c0_i32_2 = arith.constant 0 : i32
    %c0_i32_3 = arith.constant 0 : i32
    return %c0_i32, %c0_i32_0, %c0_i32_1, %c0_i32_2 : i32, i32, i32, i32
  }
  func.func @transform_3(%arg0: i32, %arg1: i32) -> (i32, i32, i32, i32) {
    %c0_i32 = arith.constant 0 : i32
    %c0_i32_0 = arith.constant 0 : i32
    %c0_i32_1 = arith.constant 0 : i32
    return %arg0, %c0_i32, %arg1, %c0_i32_0 : i32, i32, i32, i32
  }
}

</mosaic_0001>

<llo_original>
// kernel: tpu_custom_call.1
$region0: #{tpu_custom_call.1}
  #allocation0 [shape = 'u32[]', space=smem, size = 0x4, offset = 0x4, fixed_abs, tag = 'smem constant byte address 0x4 - core index']
  #allocation1 [shape = 'u32[144,128]{1,0:T(1,128)}', space=vmem, size = 0x12000, scoped, tag = 'internal scratch']
  %s0 = inlined_call_operand.hbm [shape: f32[2,4,2,128], index: 0, kind: input, shape index: {}]
  %s1 = inlined_call_operand.vmem [shape: f32[1,4,1,1], index: 1, kind: input, shape index: {}]
  %s2 = inlined_call_operand.vmem [shape: f32[1,4,1,1], index: 2, kind: input, shape index: {}]
  %s3 = inlined_call_operand.hbm [shape: f32[2,4,2,128], index: 3, kind: output, shape index: {}]
  %s4 = sld [smem:[#allocation0]]
  $region49: #{tpu_custom_call.1} parent=0
    _
  %s6 = ssub.s32 1, %s4
  %s7 = scalar_select 0, %s6, %s4
  $region1: #{tpu_custom_call.1} parent=0
    #allocation2 [shape = 'u8[8192]{0}', space=vmem, size = 0x2000, scoped, tag = 'input window, operand 0']
    #allocation3 [shape = 's32[2]{0}', space=sflag, size = 0x8, scoped, tag = 'scoped memory for tpu_custom_call.1']
    #allocation4 [shape = 's32[2]{0}', space=sflag, size = 0x8, scoped, tag = 'scoped memory for tpu_custom_call.1']
    #allocation5 [shape = 'u8[8192]{0}', space=vmem, size = 0x2000, scoped, tag = 'output window, operand 0']
    %8 = vsyncpa [#allocation3], 0
    %s9 = scalar_lea.sflag [#allocation3], 1
    %10 = vsyncpa %s9, 0
    %11 = vsyncpa [#allocation4], 0
    %s12 = scalar_lea.sflag [#allocation4], 1
    %13 = vsyncpa %s12, 0
    loop: start=0, step=1, limit=4
    $region2: #{tpu_custom_call.1} parent=1 // loop_pre_header
      _
    $region3: #{tpu_custom_call.1} parent=1 // loop_header
      %s15 = sphi 0, %s19
      %p16 = scmp.ge.s32.totalorder %s15, 4
      %s22 = sphi 0, %s34
      %s23 = sphi 0, %s30
      %s24 = sphi 0, %s22
      %s25 = sphi 0, %s23
      %s26 = sphi 0, %s24
      %s27 = sphi 0, %s25
      %s39 = sphi 0, %s41
      %s42 = sphi 0, %s39
      %s43 = sphi 0, %s42
      %s59 = sphi 0, %s43
      %s63 = sphi 0, %s63
      %s65 = sphi 0, %s63
      %s66 = sphi 0, %s65
      %s80 = sphi 0, %s66
      %s84 = sphi 0, %s84
      %s86 = sphi 0, %s84
      %s87 = sphi 0, %s86
      %s101 = sphi 0, %s87
      %s109 = sphi 0, %s111
      %s112 = sphi 0, %s109
      %s113 = sphi 0, %s112
      %s129 = sphi 0, %s113
    $region4: #{tpu_custom_call.1} parent=1 // loop_header_branch
      %18 = sbr.rel (%p16) target = $region8
    $region5: #{tpu_custom_call.1} parent=1 // loop_body
      %s20 = ssub.s32 %s15, 1
      %s21 = ssub.s32 %s15, 2
      %s28 = sadd.s32 1, %s23
      %p29 = scmp.ge.s32.totalorder %s28, 1
      %s30 = scalar_select %p29, 0, %s28
      %s31 = sadd.s32 1, %s22
      %s32 = scalar_select %p29, %s31, %s22
      %p33 = scmp.ge.s32.totalorder %s32, 2
      %s34 = scalar_select %p33, 0, %s32
      %s35 = ssub.s32 %s22, %s34
      %s36 = ssub.s32 %s23, %s30
      %s37 = sor.u32 %s35, %s36
      %p38 = scmp.eq.s32.totalorder %s37, 0
      %s40 = sadd.s32 %s39, 1
      %s41 = scalar_select %p38, %s39, %s40
      %p44 = pneg %p38
      %p45 = scmp.eq.s32.totalorder %s15, 1
      %p46 = por %p44, %p45
      %p47 = scmp.ne.s32.totalorder %s39, %s42
      %p48 = scmp.eq.s32.totalorder %s15, 0
      %p49 = por %p47, %p48
      %p50 = scmp.ne.s32.totalorder %s39, %s42
      %p51 = scmp.eq.s32.totalorder %s20, 1
      %p52 = por %p50, %p51
      %p53 = scmp.ne.s32.totalorder %s42, %s43
      %p54 = scmp.eq.s32.totalorder %s20, 0
      %p55 = por %p53, %p54
      %p56 = scmp.ne.s32.totalorder %s42, %s43
      %p57 = scmp.eq.s32.totalorder %s21, 1
      %p58 = por %p56, %p57
      %p60 = scmp.ne.s32.totalorder %s43, %s59
      %p61 = scmp.eq.s32.totalorder %s21, 0
      %p62 = por %p60, %p61
      %s64 = sadd.s32 %s63, 1
      %p67 = scmp.eq.s32.totalorder %s15, 1
      %p68 = scmp.ne.s32.totalorder %s63, %s65
      %p69 = scmp.eq.s32.totalorder %s15, 0
      %p70 = por %p68, %p69
      %p71 = scmp.ne.s32.totalorder %s63, %s65
      %p72 = scmp.eq.s32.totalorder %s20, 1
      %p73 = por %p71, %p72
      %p74 = scmp.ne.s32.totalorder %s65, %s66
      %p75 = scmp.eq.s32.totalorder %s20, 0
      %p76 = por %p74, %p75
      %p77 = scmp.ne.s32.totalorder %s65, %s66
      %p78 = scmp.eq.s32.totalorder %s21, 1
      %p79 = por %p77, %p78
      %p81 = scmp.ne.s32.totalorder %s66, %s80
      %p82 = scmp.eq.s32.totalorder %s21, 0
      %p83 = por %p81, %p82
      %s85 = sadd.s32 %s84, 1
      %p88 = scmp.eq.s32.totalorder %s15, 1
      %p89 = scmp.ne.s32.totalorder %s84, %s86
      %p90 = scmp.eq.s32.totalorder %s15, 0
      %p91 = por %p89, %p90
      %p92 = scmp.ne.s32.totalorder %s84, %s86
      %p93 = scmp.eq.s32.totalorder %s20, 1
      %p94 = por %p92, %p93
      %p95 = scmp.ne.s32.totalorder %s86, %s87
      %p96 = scmp.eq.s32.totalorder %s20, 0
      %p97 = por %p95, %p96
      %p98 = scmp.ne.s32.totalorder %s86, %s87
      %p99 = scmp.eq.s32.totalorder %s21, 1
      %p100 = por %p98, %p99
      %p102 = scmp.ne.s32.totalorder %s87, %s101
      %p103 = scmp.eq.s32.totalorder %s21, 0
      %p104 = por %p102, %p103
      %s105 = ssub.s32 %s22, %s34
      %s106 = ssub.s32 %s23, %s30
      %s107 = sor.u32 %s105, %s106
      %p108 = scmp.eq.s32.totalorder %s107, 0
      %s110 = sadd.s32 %s109, 1
      %s111 = scalar_select %p108, %s109, %s110
      %p114 = pneg %p108
      %p115 = scmp.eq.s32.totalorder %s15, 1
      %p116 = por %p114, %p115
      %p117 = scmp.ne.s32.totalorder %s109, %s112
      %p118 = scmp.eq.s32.totalorder %s15, 0
      %p119 = por %p117, %p118
      %p120 = scmp.ne.s32.totalorder %s109, %s112
      %p121 = scmp.eq.s32.totalorder %s20, 1
      %p122 = por %p120, %p121
      %p123 = scmp.ne.s32.totalorder %s112, %s113
      %p124 = scmp.eq.s32.totalorder %s20, 0
      %p125 = por %p123, %p124
      %p126 = scmp.ne.s32.totalorder %s112, %s113
      %p127 = scmp.eq.s32.totalorder %s21, 1
      %p128 = por %p126, %p127
      %p130 = scmp.ne.s32.totalorder %s113, %s129
      %p131 = scmp.eq.s32.totalorder %s21, 0
      %p132 = por %p130, %p131
      %p133 = scmp.le.s32.totalorder 1, %s15
      %p134 = scmp.lt.s32.totalorder %s15, 3
      %p135 = pnand %p133, %p134
      %p136 = pneg %p135
      // Predicated region
      $region9: #{tpu_custom_call.1} parent=5 // pred_check
        _
      $region10: #{tpu_custom_call.1} parent=5 // pred_check_branch
        %138 = sbr.rel (%p135) target = $region12
      $region11: #{tpu_custom_call.1} parent=5 // pred_region
        %s139 = ssub.s32 %s15, 1
        // Predicated region
        $region13: #{tpu_custom_call.1} parent=11 // pred_check
          %p140 = pneg %p76
        $region14: #{tpu_custom_call.1} parent=11 // pred_check_branch
          %142 = sbr.rel (%p140) target = $region16
        $region15: #{tpu_custom_call.1} parent=11 // pred_region
          _
        $region16: #{tpu_custom_call.1} parent=11 // pred_fallthru
          _
        // Predicated region
        $region17: #{tpu_custom_call.1} parent=11 // pred_check
          %p143 = pneg %p97
        $region18: #{tpu_custom_call.1} parent=11 // pred_check_branch
          %145 = sbr.rel (%p143) target = $region20
        $region19: #{tpu_custom_call.1} parent=11 // pred_region
          _
        $region20: #{tpu_custom_call.1} parent=11 // pred_fallthru
          _
      $region12: #{tpu_custom_call.1} parent=5 // pred_fallthru
        _
      %p146 = scmp.lt.s32.totalorder %s15, 2
      // Predicated region
      $region21: #{tpu_custom_call.1} parent=5 // pred_check
        %p147 = pneg %p146
      $region22: #{tpu_custom_call.1} parent=5 // pred_check_branch
        %149 = sbr.rel (%p147) target = $region24
      $region23: #{tpu_custom_call.1} parent=5 // pred_region
        // Predicated region
        $region25: #{tpu_custom_call.1} parent=23 // pred_check
          %p150 = pneg %p49
        $region26: #{tpu_custom_call.1} parent=23 // pred_check_branch
          %152 = sbr.rel (%p150) target = $region28
        $region27: #{tpu_custom_call.1} parent=23 // pred_region
          %s153 = sand.u32 %s39, 1
          %s154 = scalar_lea.sflag [#allocation3], %s153
          %s155 = sand.u32 %s39, 1
          %s156 = smul.addr %s155, 8
          %s157 = scalar_lea.vmem [#allocation2], %s156
          %s159 = ssub.s32 128, 128
          %160 = vsyncadd %s154, %s159
          %s161 = smul.addr %s22, 4
          %s162 = sadd.s32 %s23, %s161
          %s163 = smul.addr %s162, 32
          %s164 = scalar_lea.hbm %s0, %s163
          %s165 = sshll.u32 %s157, 4
          %s166 = int_to_ptr.vmem [resolvable:$true] %s165
          %171 = dma.hbm_to_vmem [thread:$0]  %s164, 128, %s166, %s154, 32, 32, 2
        $region28: #{tpu_custom_call.1} parent=23 // pred_fallthru
          _
      $region24: #{tpu_custom_call.1} parent=5 // pred_fallthru
        _
      %p172 = scmp.le.s32.totalorder 1, %s15
      %p173 = scmp.lt.s32.totalorder %s15, 3
      %p174 = pnand %p172, %p173
      %p175 = pneg %p174
      // Predicated region
      $region29: #{tpu_custom_call.1} parent=5 // pred_check
        _
      $region30: #{tpu_custom_call.1} parent=5 // pred_check_branch
        %177 = sbr.rel (%p174) target = $region32
      $region31: #{tpu_custom_call.1} parent=5 // pred_region
        %s178 = ssub.s32 %s15, 1
        %s179 = sand.u32 %s42, 1
        %s180 = scalar_lea.sflag [#allocation3], %s179
        %s181 = sand.u32 %s42, 1
        %s182 = smul.addr %s181, 8
        %s183 = scalar_lea.vmem [#allocation2], %s182
        // Predicated region
        $region33: #{tpu_custom_call.1} parent=31 // pred_check
          %p184 = pneg %p55
        $region34: #{tpu_custom_call.1} parent=31 // pred_check_branch
          %186 = sbr.rel (%p184) target = $region36
        $region35: #{tpu_custom_call.1} parent=31 // pred_region
          %187 = dma.done %s180, 128
        $region36: #{tpu_custom_call.1} parent=31 // pred_fallthru
          _
        %s188 = sand.u32 %s42, 1
        %s189 = scalar_lea.sflag [#allocation3], %s188
        %s190 = sand.u32 %s42, 1
        %s191 = smul.addr %s190, 8
        %s192 = scalar_lea.vmem [#allocation2], %s191
        %p193 = pneg %p55
        %p194 = pneg %p52
        %p195 = pneg %p76
        %p196 = pneg %p73
        %p197 = pneg %p97
        %p198 = pneg %p94
        %p199 = pneg %p125
        %p200 = pneg %p122
        %s201 = sand.u32 %s112, 1
        %s202 = scalar_lea.sflag [#allocation4], %s201
        %s203 = sand.u32 %s112, 1
        %s204 = smul.addr %s203, 8
        %s205 = scalar_lea.vmem [#allocation5], %s204
        %v206 = vld [vmem:[%s183] sm:$0x3]
        %v207 = vld [vmem:[%s183 + $0x2] sm:$0x3]
        %v208 = vld [vmem:[%s183 + $0x4] sm:$0x3]
        %v209 = vld [vmem:[%s183 + $0x6] sm:$0x3]
        %vm210 = vcmask 1041408
        %v211 = vsel %vm210, %v206, 0.0
        %v212 = vsel %vm210, %v207, 0.0
        %v213 = vadd.f32 %v211, %v212
        %v214 = vsel %vm210, %v208, 0.0
        %v215 = vadd.f32 %v213, %v214
        %v216 = vsel %vm210, %v209, 0.0
        %v217 = vadd.f32 %v215, %v216
        %v218 = vmul.f32 %v206, %v206
        %v219 = vmul.f32 %v207, %v207
        %v220 = vmul.f32 %v208, %v208
        %v221 = vmul.f32 %v209, %v209
        %v222 = vsel %vm210, %v218, 0.0
        %v223 = vsel %vm210, %v219, 0.0
        %v224 = vadd.f32 %v222, %v223
        %v225 = vsel %vm210, %v220, 0.0
        %v226 = vadd.f32 %v224, %v225
        %v227 = vsel %vm210, %v221, 0.0
        %v228 = vadd.f32 %v226, %v227
        %v229 = vmul.f32 %v217, 0.25
        %v230 = vmul.f32 %v228, 0.25
        %v231 = vmul.f32 %v229, %v229
        %v232 = vsub.f32 %v230, %v231
        %v233 = vadd.f32 %v232, 1e-05
        %v234 = vrsqrt.pop %v233
        %v235 = vsub.f32 %v206, %v229
        %v236 = vsub.f32 %v207, %v229
        %v237 = vsub.f32 %v208, %v229
        %v238 = vsub.f32 %v209, %v229
        %v239 = vmul.f32 %v235, %v234
        %v240 = vmul.f32 %v236, %v234
        %v241 = vmul.f32 %v237, %v234
        %v242 = vmul.f32 %v238, %v234
        %v243 = vld [vmem:[%s1] sm:$0x1]
        %v244 = vld [vmem:[%s1 + $0x1] sm:$0x1]
        %v245 = vld [vmem:[%s1 + $0x2] sm:$0x1]
        %v246 = vld [vmem:[%s1 + $0x3] sm:$0x1]
        %v251 = vlaneseq
        %v252 = vshrl.u32 %v251, 7
        %v253 = vsub.s32 0, %v252
        %v254 = vrot.slane %v243, %v253
        %v255 = vlaneseq
        %v256 = vshrl.u32 %v255, 7
        %v257 = vsub.s32 0, %v256
        %v258 = vrot.slane %v244, %v257
        %v259 = vlaneseq
        %v260 = vshrl.u32 %v259, 7
        %v261 = vsub.s32 0, %v260
        %v262 = vrot.slane %v245, %v261
        %v263 = vlaneseq
        %v264 = vshrl.u32 %v263, 7
        %v265 = vsub.s32 0, %v264
        %v266 = vrot.slane %v246, %v265
        %267 = vset.pattern.permute.xlu0 0
        %268 = vperm.xlu0 %267, %v254
        %v269 = vpop.permute.xlu0 %268
        %271 = vset.pattern.permute.xlu0 0
        %272 = vperm.xlu0 %271, %v258
        %v273 = vpop.permute.xlu0 %272
        %275 = vset.pattern.permute.xlu0 0
        %276 = vperm.xlu0 %275, %v262
        %v277 = vpop.permute.xlu0 %276
        %279 = vset.pattern.permute.xlu0 0
        %280 = vperm.xlu0 %279, %v266
        %v281 = vpop.permute.xlu0 %280
        %v283 = vmul.f32 %v239, %v269
        %v284 = vmul.f32 %v240, %v273
        %v285 = vmul.f32 %v241, %v277
        %v286 = vmul.f32 %v242, %v281
        %v287 = vld [vmem:[%s2] sm:$0x1]
        %v288 = vld [vmem:[%s2 + $0x1] sm:$0x1]
        %v289 = vld [vmem:[%s2 + $0x2] sm:$0x1]
        %v290 = vld [vmem:[%s2 + $0x3] sm:$0x1]
        %v295 = vlaneseq
        %v296 = vshrl.u32 %v295, 7
        %v297 = vsub.s32 0, %v296
        %v298 = vrot.slane %v287, %v297
        %v299 = vlaneseq
        %v300 = vshrl.u32 %v299, 7
        %v301 = vsub.s32 0, %v300
        %v302 = vrot.slane %v288, %v301
        %v303 = vlaneseq
        %v304 = vshrl.u32 %v303, 7
        %v305 = vsub.s32 0, %v304
        %v306 = vrot.slane %v289, %v305
        %v307 = vlaneseq
        %v308 = vshrl.u32 %v307, 7
        %v309 = vsub.s32 0, %v308
        %v310 = vrot.slane %v290, %v309
        %311 = vset.pattern.permute.xlu0 0
        %312 = vperm.xlu0 %311, %v298
        %v313 = vpop.permute.xlu0 %312
        %315 = vset.pattern.permute.xlu0 0
        %316 = vperm.xlu0 %315, %v302
        %v317 = vpop.permute.xlu0 %316
        %319 = vset.pattern.permute.xlu0 0
        %320 = vperm.xlu0 %319, %v306
        %v321 = vpop.permute.xlu0 %320
        %323 = vset.pattern.permute.xlu0 0
        %324 = vperm.xlu0 %323, %v310
        %v325 = vpop.permute.xlu0 %324
        %v327 = vadd.f32 %v283, %v313
        %v328 = vadd.f32 %v284, %v317
        %v329 = vadd.f32 %v285, %v321
        %v330 = vadd.f32 %v286, %v325
        %331 = vst [vmem:[%s205] sm:$0x3] %v327
        %332 = vst [vmem:[%s205 + $0x2] sm:$0x3] %v328
        %333 = vst [vmem:[%s205 + $0x4] sm:$0x3] %v329
        %334 = vst [vmem:[%s205 + $0x6] sm:$0x3] %v330
        %s335 = sand.u32 %s112, 1
        %s336 = scalar_lea.sflag [#allocation4], %s335
        %s337 = sand.u32 %s112, 1
        %s338 = smul.addr %s337, 8
        %s339 = scalar_lea.vmem [#allocation5], %s338
        // Predicated region
        $region37: #{tpu_custom_call.1} parent=31 // pred_check
          %p340 = pneg %p122
        $region38: #{tpu_custom_call.1} parent=31 // pred_check_branch
          %342 = sbr.rel (%p340) target = $region40
        $region39: #{tpu_custom_call.1} parent=31 // pred_region
          %s344 = ssub.s32 128, 128
          %345 = vsyncadd %s336, %s344
          %s346 = smul.addr %s24, 4
          %s347 = sadd.s32 %s25, %s346
          %s348 = smul.addr %s347, 32
          %s349 = scalar_lea.hbm %s3, %s348
          %s350 = sshll.u32 %s339, 4
          %s351 = int_to_ptr.vmem [resolvable:$true] %s350
          %356 = dma.vmem_to_hbm [thread:$0]  %s351, 128, %s349, %s336, 32, 32, 2
        $region40: #{tpu_custom_call.1} parent=31 // pred_fallthru
          _
      $region32: #{tpu_custom_call.1} parent=5 // pred_fallthru
        _
      %p357 = scmp.le.s32.totalorder 2, %s15
      // Predicated region
      $region41: #{tpu_custom_call.1} parent=5 // pred_check
        %p358 = pneg %p357
      $region42: #{tpu_custom_call.1} parent=5 // pred_check_branch
        %360 = sbr.rel (%p358) target = $region44
      $region43: #{tpu_custom_call.1} parent=5 // pred_region
        %s361 = ssub.s32 %s15, 2
        // Predicated region
        $region45: #{tpu_custom_call.1} parent=43 // pred_check
          %p362 = pneg %p128
        $region46: #{tpu_custom_call.1} parent=43 // pred_check_branch
          %364 = sbr.rel (%p362) target = $region48
        $region47: #{tpu_custom_call.1} parent=43 // pred_region
          %s365 = sand.u32 %s113, 1
          %s366 = scalar_lea.sflag [#allocation4], %s365
          %s367 = sand.u32 %s113, 1
          %s368 = smul.addr %s367, 8
          %s369 = scalar_lea.vmem [#allocation5], %s368
          %370 = dma.done %s366, 128
        $region48: #{tpu_custom_call.1} parent=43 // pred_fallthru
          _
      $region44: #{tpu_custom_call.1} parent=5 // pred_fallthru
        _
    $region6: #{tpu_custom_call.1} parent=1 // loop_footer
      %s19 = sadd.s32 1, %s15
    $region7: #{tpu_custom_call.1} parent=1 // loop_footer_branch
      %14 = sbr.rel target = $region3
    $region8: #{tpu_custom_call.1} parent=1 // loop_exit
      _
    %371 = vsyncpa [#allocation3], 1
    %s372 = scalar_lea.sflag [#allocation3], 1
    %373 = vsyncpa %s372, 1
    %374 = vsyncpa [#allocation4], 1
    %s375 = scalar_lea.sflag [#allocation4], 1
    %376 = vsyncpa %s375, 1

</llo_original>
